<compile_context>
chip_gen: v7x
topology: tpu7x:2x2x1
jax: 0.10.0
libtpu: 0.0.40
codegen_flags: <defaults>
</compile_context>

<pallas_src>
import jax
import jax.numpy as jnp
from jax.experimental import pallas as pl
from jax.experimental.pallas import tpu as pltpu

_MIB = 1024 * 1024


def _round_up(x, m):
    return ((x + m - 1) // m) * m


def _make_logreg_kernel(k, n_features):
    def kernel(x_ref, w_ref, b_ref, o_ref):
        # x_ref: (tile_rows, k*F) VMEM    w_ref: (1, k*F) VMEM (resident)
        # b_ref: (1, 1) SMEM              o_ref: (tile_rows, k) VMEM
        x = x_ref[...].astype(jnp.float32)
        w = w_ref[...].astype(jnp.float32)          # broadcast over the batch tile
        prod = x * w                                # VPU multiply, f32
        if k == 1:
            logits = jnp.sum(prod, axis=-1, keepdims=True)
        else:
            # Segmented lane reduction: lanes [j*F, (j+1)*F) hold original row (i*k + j).
            cols = [
                jnp.sum(prod[:, j * n_features:(j + 1) * n_features],
                        axis=-1, keepdims=True)
                for j in range(k)
            ]
            logits = jnp.concatenate(cols, axis=-1)
        logits = logits + b_ref[0, 0]
        o_ref[...] = jax.nn.sigmoid(logits).astype(o_ref.dtype)

    return kernel


def _vmem_budget_bytes():
    """(scoped working-set target, vmem_limit_bytes) derived from real VMEM capacity."""
    try:
        cap = int(pltpu.get_tpu_info().vmem_capacity_bytes)
    except Exception:
        cap = 64 * _MIB  # conservative fallback (v7x per-TensorCore capacity)
    # v5e/v6e (128 MiB) -> ~56 MiB working set / 64 MiB scoped limit
    # v7x    (64 MiB)  -> ~40 MiB working set / 48 MiB scoped limit
    scoped_target = max(16 * _MIB, min(cap * 5 // 8, 56 * _MIB))
    vmem_limit = max(32 * _MIB, min(scoped_target + 8 * _MIB, cap - 4 * _MIB))
    return scoped_target, int(vmem_limit)


def logistic_regression_forward(x, weight, bias, *, interpret=False):
    """sigmoid(x @ weight.T + bias).  x: (..., F), weight: (1, F), bias: (1,) -> (..., 1)."""
    orig_shape = x.shape
    F = orig_shape[-1]
    x2 = x.reshape(-1, F)
    B = x2.shape[0]
    out_dtype = x.dtype

    itemsize = jnp.dtype(x.dtype).itemsize
    out_itemsize = jnp.dtype(out_dtype).itemsize
    sub = {4: 8, 2: 16, 1: 32}.get(itemsize, 8)       # sublane multiple for x's dtype

    # ---- small-F lane folding: pack k rows into one (up to) 128-lane row ----
    k = 1
    if F < 128 and 128 % F == 0:
        k = min(128 // F, 8)                          # cap the unrolled segmented reduce
        while k > 1 and (B % k != 0 or (B // k) < sub):
            k //= 2
    L = k * F
    rows = B // k
    xf = x2.reshape(rows, L) if k > 1 else x2         # free: merges contiguous minor dims
    wf = jnp.tile(weight, (1, k)) if k > 1 else weight

    # ---- degenerate tiny batch only: pad to one sublane group (copies < `sub` rows) ----
    rows_p = rows
    if rows_p < sub:
        xf = jnp.pad(xf, ((0, sub - rows_p), (0, 0)))
        rows_p = sub

    # ---- byte-based tile sizing from VMEM capacity (lane-padded footprints) ----
    padded_L = _round_up(L, 128)
    scoped_target, vmem_limit = _vmem_budget_bytes()
    x_budget = scoped_target - 2 * _MIB
    bytes_per_row = (
        2 * padded_L * itemsize                       # double-buffered x tile
        + padded_L * (4 if itemsize >= 4 else 8)      # elementwise temps (prod [+ f32 upcast])
        + 2 * 128 * out_itemsize                      # double-buffered lane-padded output tile
        + (k + 4) * 128 * 4                           # segment sums / logits / sigmoid temps
    )
    tile_rows = max(sub, (x_budget // bytes_per_row) // sub * sub)
    tile_rows = min(tile_rows, _round_up(rows_p, sub))

    num_tiles = pl.cdiv(rows_p, tile_rows)
    # Give v7x's two TensorCores at least 2 grid steps when possible; a single extra
    # ~0.35us step is negligible on single-TC v5e/v6e.
    if num_tiles < 2 and rows_p > sub:
        tile_rows = max(sub, _round_up(pl.cdiv(rows_p, 2), sub))
        num_tiles = pl.cdiv(rows_p, tile_rows)

    bias_smem = bias.reshape(1, 1).astype(jnp.float32)

    out = pl.pallas_call(
        _make_logreg_kernel(k, F),
        out_shape=jax.ShapeDtypeStruct((rows_p, k), out_dtype),
        grid_spec=pltpu.PrefetchScalarGridSpec(
            num_scalar_prefetch=0,
            grid=(num_tiles,),
            in_specs=[
                pl.BlockSpec((tile_rows, L), lambda i: (i, 0)),        # x batch tile
                pl.BlockSpec((1, L), lambda i: (0, 0)),                # weight, resident
                pl.BlockSpec(memory_space=pltpu.MemorySpace.SMEM),     # bias scalar
            ],
            out_specs=pl.BlockSpec((tile_rows, k), lambda i: (i, 0)),
        ),
        compiler_params=pltpu.CompilerParams(
            dimension_semantics=("parallel",),        # shards batch tiles across v7x's 2 TCs
            vmem_limit_bytes=vmem_limit,
        ),
        interpret=interpret,
    )(xf, wf, bias_smem)

    # Unfold: folded row i, lane group j  ->  original row i*k + j.
    return out.reshape(rows_p * k)[:B].reshape(orig_shape[:-1] + (1,))


if __name__ == "__main__":
    key = jax.random.PRNGKey(0)

    def run_case(case_key, batch, n_features):
        kx, kw, kb = jax.random.split(case_key, 3)
        bound = 1.0 / float(n_features) ** 0.5
        # Shapes follow nn.Linear(n_features, 1): weight (1, F), bias (1,)
        weight = jax.random.uniform(kw, (1, n_features), jnp.float32, -bound, bound)
        bias = jax.random.uniform(kb, (1,), jnp.float32, -bound, bound)
        x = jax.random.normal(kx, (batch, n_features), jnp.float32)

        y = jax.block_until_ready(logistic_regression_forward(x, weight, bias))

        # Exact-f32 elementwise reference (avoids any MXU default-precision ambiguity).
        y_ref = jax.nn.sigmoid(jnp.sum(x * weight, axis=-1, keepdims=True) + bias)
        assert y.shape == (batch, 1)
        assert jnp.allclose(y, y_ref, atol=1e-5, rtol=1e-5), (batch, n_features)

    # Small shapes consistent with LogisticRegression(n_input_features=32): x is (batch, 32).
    run_case(key, batch=8, n_features=32)                              # single full tile
    run_case(jax.random.fold_in(key, 1), batch=100, n_features=32)     # lane folding (k=4) + partial edge tile
    run_case(jax.random.fold_in(key, 2), batch=52, n_features=96)      # F not dividing 128, partial edge tile

    print("KERNEL_OK")
</pallas_src>

<mosaic_0001>
module attributes {stable_mosaic.version = 11 : i64} {
  func.func @kernel(%arg0: i32, %arg1: memref<8x32xf32, #tpu.memory_space<vmem>>, %arg2: memref<1x32xf32, #tpu.memory_space<vmem>>, %arg3: memref<1x1xf32, #tpu.memory_space<smem>>, %arg4: memref<8x1xf32, #tpu.memory_space<vmem>>) attributes {dimension_semantics = [#tpu.dimension_semantics<parallel>], iteration_bounds = array<i64: 1>, scalar_prefetch = 0 : i64, scratch_operands = 0 : i64, tpu.core_type = #tpu.core_type<tc>, window_params = [{transform_indices = @transform_0, window_bounds = array<i64: 8, 32>}, {pipeline_mode = #tpu.pipeline_mode<synchronous>, transform_indices = @transform_1, window_bounds = array<i64: 1, 32>}, {transform_indices = @transform_2, window_bounds = array<i64: 1, 1>}, {transform_indices = @transform_3, window_bounds = array<i64: 8, 1>}]} {
    %c0 = arith.constant 0 : index
    %c0_0 = arith.constant 0 : index
    %0 = vector.load %arg1[%c0, %c0_0] : memref<8x32xf32, #tpu.memory_space<vmem>>, vector<8x32xf32>
    %c0_1 = arith.constant 0 : index
    %c0_2 = arith.constant 0 : index
    %1 = vector.load %arg2[%c0_1, %c0_2] : memref<1x32xf32, #tpu.memory_space<vmem>>, vector<1x32xf32>
    %2 = vector.broadcast %1 : vector<1x32xf32> to vector<8x32xf32>
    %3 = arith.mulf %0, %2 : vector<8x32xf32>
    %cst = arith.constant dense<0.000000e+00> : vector<8xf32>
    %4 = vector.multi_reduction <add>, %3, %cst [1] : vector<8x32xf32> to vector<8xf32>
    %5 = vector.shape_cast %4 : vector<8xf32> to vector<8x1xf32>
    %c0_3 = arith.constant 0 : index
    %c0_4 = arith.constant 0 : index
    %6 = memref.load %arg3[%c0_3, %c0_4] : memref<1x1xf32, #tpu.memory_space<smem>>
    %7 = vector.broadcast %6 : f32 to vector<8x1xf32>
    %8 = arith.addf %5, %7 : vector<8x1xf32>
    %9 = arith.negf %8 : vector<8x1xf32>
    %10 = math.exp %9 : vector<8x1xf32>
    %cst_5 = arith.constant 1.000000e+00 : f32
    %11 = vector.broadcast %cst_5 : f32 to vector<8x1xf32>
    %12 = arith.addf %11, %10 : vector<8x1xf32>
    %13 = arith.divf %11, %12 : vector<8x1xf32>
    %c0_6 = arith.constant 0 : index
    %c0_7 = arith.constant 0 : index
    %14 = vector.load %arg4[%c0_6, %c0_7] : memref<8x1xf32, #tpu.memory_space<vmem>>, vector<8x1xf32>
    tpu.vector_store %arg4[%c0_6, %c0_7], %13 {strides = array<i32>} : memref<8x1xf32, #tpu.memory_space<vmem>>, vector<8x1xf32>,
    return
  }
  func.func @transform_0(%arg0: i32) -> (i32, i32) {
    %c0_i32 = arith.constant 0 : i32
    %c0_i32_0 = arith.constant 0 : i32
    return %arg0, %c0_i32 : i32, i32
  }
  func.func @transform_1(%arg0: i32) -> (i32, i32) {
    %c0_i32 = arith.constant 0 : i32
    %c0_i32_0 = arith.constant 0 : i32
    %c0_i32_1 = arith.constant 0 : i32
    return %c0_i32, %c0_i32_0 : i32, i32
  }
  func.func @transform_2(%arg0: i32) -> (i32, i32) {
    %c0_i32 = arith.constant 0 : i32
    %c0_i32_0 = arith.constant 0 : i32
    %c0_i32_1 = arith.constant 0 : i32
    return %c0_i32, %c0_i32_0 : i32, i32
  }
  func.func @transform_3(%arg0: i32) -> (i32, i32) {
    %c0_i32 = arith.constant 0 : i32
    %c0_i32_0 = arith.constant 0 : i32
    return %arg0, %c0_i32 : i32, i32
  }
}

</mosaic_0001>

<llo_original>
// kernel: tpu_custom_call.1
$region0: #{tpu_custom_call.1}
  #allocation0 [shape = 'u32[]', space=smem, size = 0x4, offset = 0x4, fixed_abs, tag = 'smem constant byte address 0x4 - core index']
  #allocation1 [shape = 'u32[144,128]{1,0:T(1,128)}', space=vmem, size = 0x12000, scoped, tag = 'internal scratch']
  #allocation2 [shape = 'f32[1,1]{1,0:T(1,128)S(6)}', space=smem, size = 0x200, scoped, tag = 'scoped memory for tpu_custom_call.1']
  %s0 = inlined_call_operand.hbm [shape: f32[8,32], index: 0, kind: input, shape index: {}]
  %s1 = inlined_call_operand.vmem [shape: f32[1,32], index: 1, kind: input, shape index: {}]
  %s2 = inlined_call_operand.<no memory space> [shape: f32[1,1], index: 2, kind: input, shape index: {}]
  %s3 = inlined_call_operand.vmem [shape: f32[8,1], index: 3, kind: output, shape index: {}]
  %s4 = sld [smem:[#allocation0]]
  $region26: #{tpu_custom_call.1} parent=0
    _
  %s6 = ssub.s32 1, %s4
  %s7 = scalar_select 0, %s6, %s4
  %8 = sst [smem:[#allocation2]] %s2
  $region1: #{tpu_custom_call.1} parent=0
    #allocation3 [shape = 'u8[4096]{0}', space=vmem, size = 0x1000, scoped, tag = 'input window, operand 0, single buffered']
    #allocation4 [shape = 's32[1]{0}', space=sflag, size = 0x4, scoped, tag = 'scoped memory for tpu_custom_call.1']
    %9 = vsyncpa [#allocation4], 0
    // Predicated region
    $region2: #{tpu_custom_call.1} parent=1 // pred_check
      _
    $region3: #{tpu_custom_call.1} parent=1 // pred_check_branch
      %11 = sbr.rel (0) target = $region5
    $region4: #{tpu_custom_call.1} parent=1 // pred_region
      %s13 = ssub.s32 128, 128
      %14 = vsyncadd [#allocation4], %s13
      %s16 = sshll.u32 [#allocation3], 4
      %s17 = int_to_ptr.vmem [resolvable:$true] %s16
      %19 = dma.hbm_to_vmem [thread:$0]  %s0, 128, %s17, [#allocation4]
    $region5: #{tpu_custom_call.1} parent=1 // pred_fallthru
      _
    // Predicated region
    $region6: #{tpu_custom_call.1} parent=1 // pred_check
      _
    $region7: #{tpu_custom_call.1} parent=1 // pred_check_branch
      %21 = sbr.rel (0) target = $region9
    $region8: #{tpu_custom_call.1} parent=1 // pred_region
      _
    $region9: #{tpu_custom_call.1} parent=1 // pred_fallthru
      _
    // Predicated region
    $region10: #{tpu_custom_call.1} parent=1 // pred_check
      _
    $region11: #{tpu_custom_call.1} parent=1 // pred_check_branch
      %23 = sbr.rel (0) target = $region13
    $region12: #{tpu_custom_call.1} parent=1 // pred_region
      _
    $region13: #{tpu_custom_call.1} parent=1 // pred_fallthru
      _
    // Predicated region
    $region14: #{tpu_custom_call.1} parent=1 // pred_check
      _
    $region15: #{tpu_custom_call.1} parent=1 // pred_check_branch
      %25 = sbr.rel (0) target = $region17
    $region16: #{tpu_custom_call.1} parent=1 // pred_region
      %26 = dma.done [#allocation4], 128
    $region17: #{tpu_custom_call.1} parent=1 // pred_fallthru
      _
    %v27 = vld [vmem:[#allocation3] sm:$0xff]
    %v28 = vld [vmem:[%s1] sm:$0x1]
    %v30 = vlaneseq
    %v31 = vshrl.u32 %v30, 7
    %v32 = vsub.s32 0, %v31
    %v33 = vrot.slane %v28, %v32
    %v35 = vmul.f32 %v27, %v33
    %vm36 = vcmask 261120
    %v37 = vsel %vm36, %v35, 0.0
    %38 = vadd.xlane.f32.xlu0 %v37
    %v39 = vpop.xlane.xlu0 %38
    %s40 = sld [smem:[#allocation2]]
    %v41 = vstv %s40
    %v42 = vadd.f32 %v39, %v41
    %v43 = vxor.u32 %v42, 2147483648
    %v44 = vmul.f32 %v43, 1.442695
    %v45 = vpow.pop %v44
    %v46 = vadd.f32 %v45, 1.0
    %v47 = vrcp.pop %v46
    %v48 = vmul.f32 1.0, %v47
    %vm49 = vcmask 7168
    %50 = vst.msk [vmem:[%s3] sm:$0xff] %vm49, %v48
    // Predicated region
    $region18: #{tpu_custom_call.1} parent=1 // pred_check
      _
    $region19: #{tpu_custom_call.1} parent=1 // pred_check_branch
      %52 = sbr.rel (0) target = $region21
    $region20: #{tpu_custom_call.1} parent=1 // pred_region
      _
    $region21: #{tpu_custom_call.1} parent=1 // pred_fallthru
      _
    // Predicated region
    $region22: #{tpu_custom_call.1} parent=1 // pred_check
      _
    $region23: #{tpu_custom_call.1} parent=1 // pred_check_branch
      %54 = sbr.rel (0) target = $region25
    $region24: #{tpu_custom_call.1} parent=1 // pred_region
      _
    $region25: #{tpu_custom_call.1} parent=1 // pred_fallthru
      _
    %55 = vsyncpa [#allocation4], 1

</llo_original>
